<compile_context>
chip_gen: v7x
topology: tpu7x:2x2x1
jax: 0.10.0
libtpu: 0.0.40
codegen_flags: <defaults>
</compile_context>

<pallas_src>
import numpy as np
import jax
import jax.numpy as jnp
from jax.experimental import pallas as pl
from jax.experimental.pallas import tpu as pltpu

D_CODE = 8
N_LABELS = 4
D_IN = D_CODE + N_LABELS                           # 12
D_HID = 32                                         # d_hid[0]
NC = (4, 4, 1)                                     # nc_str = '4,4,1'
KS = (3, 3)                                        # ks_str = '3,3'
N_FEATS = 256
HW = int(np.sqrt(N_FEATS // NC[-1])) // 4          # 4
RESHAPE_SIZE = NC[0] * HW * HW                     # 64
H1 = 2 * HW                                        # 8  (after first upsample)
H2 = 4 * HW                                        # 16 (after second upsample)
D_MID = NC[1] * H1 * H1                            # 256 (flattened conv1 output)
BN_EPS = 1e-5
FUSED_MAX_BATCH = 1024                             # single-kernel path VMEM guardrail


# ----------------------------- Pallas kernels -----------------------------

def _bn_train(x, gamma, beta):
    """BatchNorm1d, training mode: batch stats, biased variance (matches torch)."""
    mu = jnp.mean(x, axis=0, keepdims=True)
    var = jnp.mean((x - mu) ** 2, axis=0, keepdims=True)
    return (x - mu) * jax.lax.rsqrt(var + BN_EPS) * gamma + beta
    # TODO(synk): BatchNorm running_mean/running_var buffer updates (training-time
    # side effect) and eval-mode running-stat normalization are not modeled.


def _fused_kernel(x_ref, w1t_ref, b1_ref, g1_ref, be1_ref,
                  w2t_ref, b2_ref, g2_ref, be2_ref,
                  m1_ref, cb1_ref, m2_ref, cb2_ref, o_ref):
    """Whole forward in one kernel: fc1->bn1->relu->fc2->bn2->[ups->conv1]->relu->
    [ups->conv2]->sigmoid, with the bracketed linear stages folded into M1/M2."""
    x = x_ref[...]
    h = jnp.dot(x, w1t_ref[...], preferred_element_type=jnp.float32) + b1_ref[...]
    h = _bn_train(h, g1_ref[...], be1_ref[...])
    h = jnp.maximum(h, 0.0)
    y = jnp.dot(h, w2t_ref[...], preferred_element_type=jnp.float32) + b2_ref[...]
    y = _bn_train(y, g2_ref[...], be2_ref[...])
    h2 = jnp.dot(y, m1_ref[...], preferred_element_type=jnp.float32) + cb1_ref[...]
    h2 = jnp.maximum(h2, 0.0)
    z = jnp.dot(h2, m2_ref[...], preferred_element_type=jnp.float32) + cb2_ref[...]
    # sigmoid via EUP exp + approximate reciprocal (keeps VALU slots free)
    o_ref[...] = pl.reciprocal(1.0 + jnp.exp(-z), approx=True)


def _mlp_kernel(x_ref, w1_ref, b1_ref, g1_ref, be1_ref,
                w2_ref, b2_ref, g2_ref, be2_ref, o_ref):
    """fc1 -> BatchNorm1d -> relu -> fc2 -> BatchNorm1d (whole batch; BN couples rows)."""
    x = x_ref[...]
    h = jnp.dot(x, w1_ref[...], preferred_element_type=jnp.float32) + b1_ref[...]
    h = _bn_train(h, g1_ref[...], be1_ref[...])
    h = jnp.maximum(h, 0.0)
    y = jnp.dot(h, w2_ref[...], preferred_element_type=jnp.float32) + b2_ref[...]
    o_ref[...] = _bn_train(y, g2_ref[...], be2_ref[...])


def _gen_kernel(y_ref, m1_ref, b1_ref, m2_ref, b2_ref, o_ref):
    """Fused upsample->conv1->relu->upsample->conv2->sigmoid on one batch row tile."""
    h = jnp.dot(y_ref[...], m1_ref[...], preferred_element_type=jnp.float32) + b1_ref[...]
    h = jnp.maximum(h, 0.0)
    z = jnp.dot(h, m2_ref[...], preferred_element_type=jnp.float32) + b2_ref[...]
    o_ref[...] = pl.reciprocal(1.0 + jnp.exp(-z), approx=True)


# ----------------------------- kernel wrappers -----------------------------

def fused_forward(x, ops):
    """Single-call whole-batch forward (B small enough for everything in VMEM)."""
    B = x.shape[0]
    flops = 2 * B * (D_IN * D_HID + D_HID * RESHAPE_SIZE
                     + RESHAPE_SIZE * D_MID + D_MID * N_FEATS)
    bytes_acc = 4 * (B * D_IN + B * N_FEATS
                     + D_IN * D_HID + 4 * D_HID
                     + D_HID * RESHAPE_SIZE + 4 * RESHAPE_SIZE
                     + ops["m1"].size + ops["cb1"].size
                     + ops["m2"].size + ops["cb2"].size)
    return pl.pallas_call(
        _fused_kernel,
        out_shape=jax.ShapeDtypeStruct((B, N_FEATS), jnp.float32),
        compiler_params=pltpu.CompilerParams(vmem_limit_bytes=32 * 1024 * 1024),
        cost_estimate=pl.CostEstimate(flops=flops, transcendentals=B * N_FEATS,
                                      bytes_accessed=bytes_acc),
    )(x, ops["w1t"], ops["b1"], ops["g1"], ops["be1"],
      ops["w2t"], ops["b2"], ops["g2"], ops["be2"],
      ops["m1"], ops["cb1"], ops["m2"], ops["cb2"])


def mlp_forward(x, w1t, b1, g1, be1, w2t, b2, g2, be2):
    B = x.shape[0]
    flops = 2 * B * (D_IN * D_HID + D_HID * RESHAPE_SIZE)
    bytes_acc = 4 * (B * D_IN + D_IN * D_HID + 4 * D_HID
                     + D_HID * RESHAPE_SIZE + 4 * RESHAPE_SIZE + B * RESHAPE_SIZE)
    return pl.pallas_call(
        _mlp_kernel,
        out_shape=jax.ShapeDtypeStruct((B, RESHAPE_SIZE), jnp.float32),
        cost_estimate=pl.CostEstimate(flops=flops, transcendentals=0,
                                      bytes_accessed=bytes_acc),
    )(x, w1t, b1, g1, be1, w2t, b2, g2, be2)


def _round_up(n, m):
    return ((n + m - 1) // m) * m


def generator_conv_path(y, m1, cb1, m2, cb2, *, block_rows=512):
    """Batch-row-tiled generator path; weights resident in VMEM across the grid."""
    B = y.shape[0]
    tb = min(block_rows, _round_up(B, 8))          # row tile, multiple of 8 sublanes
    bp = _round_up(B, tb)
    if bp != B:
        y = jnp.pad(y, ((0, bp - B), (0, 0)))
    grid = (bp // tb,)
    flops = 2 * bp * (RESHAPE_SIZE * D_MID + D_MID * N_FEATS)
    bytes_acc = 4 * (bp * RESHAPE_SIZE + m1.size + cb1.size + m2.size + cb2.size
                     + bp * N_FEATS)
    out = pl.pallas_call(
        _gen_kernel,
        grid=grid,
        in_specs=[
            pl.BlockSpec((tb, RESHAPE_SIZE), lambda i: (i, 0)),
            pl.BlockSpec(m1.shape, lambda i: (0, 0)),      # (64, 256) resident
            pl.BlockSpec(cb1.shape, lambda i: (0, 0)),     # (1, 256)
            pl.BlockSpec(m2.shape, lambda i: (0, 0)),      # (256, 256) resident
            pl.BlockSpec(cb2.shape, lambda i: (0, 0)),     # (1, 256)
        ],
        out_specs=pl.BlockSpec((tb, N_FEATS), lambda i: (i, 0)),
        out_shape=jax.ShapeDtypeStruct((bp, N_FEATS), jnp.float32),
        compiler_params=pltpu.CompilerParams(dimension_semantics=("parallel",)),
        cost_estimate=pl.CostEstimate(flops=flops, transcendentals=bp * N_FEATS,
                                      bytes_accessed=bytes_acc),
    )(y, m1, cb1, m2, cb2)
    return out[:B] if bp != B else out


# -------------------- operator construction (weight prep, one-time) --------------------

def _interp_matrix(n_in, n_out):
    """Linear interp weights matching nn.UpsamplingBilinear2d (align_corners=True)."""
    if n_in == 1:
        return np.ones((n_out, 1), np.float64)
    coords = np.arange(n_out, dtype=np.float64) * (n_in - 1) / (n_out - 1)
    lo = np.clip(np.floor(coords).astype(np.int64), 0, n_in - 2)
    frac = coords - lo
    A = np.zeros((n_out, n_in), np.float64)
    A[np.arange(n_out), lo] = 1.0 - frac
    A[np.arange(n_out), lo + 1] = frac
    return A


def _upsample2x_operator(c, h, w):
    """Dense (c*h*w, c*2h*2w) bilinear-x2 operator on NCHW-flattened planes."""
    ah = _interp_matrix(h, 2 * h)                  # (2h, h)
    aw = _interp_matrix(w, 2 * w)                  # (2w, w)
    p = np.kron(ah, aw).T                          # (h*w, 2h*2w)
    return np.kron(np.eye(c), p).astype(np.float32)


def _conv_operator(weight, h, w):
    """Dense (cin*h*w, cout*h*w) operator for Conv2d(k, stride=1, pad=(k-1)//2), NCHW flatten.

    weight is torch-layout (Cout, Cin, kh, kw)."""
    weight = np.asarray(weight)
    cout, cin, kh, kw = weight.shape
    ph, pw = (kh - 1) // 2, (kw - 1) // 2
    ih = np.arange(h)[:, None]
    oh = np.arange(h)[None, :]
    iw = np.arange(w)[:, None]
    ow = np.arange(w)[None, :]
    dkh = ih - oh + ph                             # (h, h): kernel row used for (ih, oh)
    dkw = iw - ow + pw                             # (w, w)
    vh = (dkh >= 0) & (dkh < kh)
    vw = (dkw >= 0) & (dkw < kw)
    g = weight[:, :, np.clip(dkh, 0, kh - 1)[:, :, None, None],
               np.clip(dkw, 0, kw - 1)[None, None, :, :]]     # (cout,cin,ih,oh,iw,ow)
    mask = (vh[:, :, None, None] & vw[None, None, :, :]).astype(np.float32)
    g = g * mask
    op = np.transpose(g, (1, 2, 4, 0, 3, 5))                  # (cin,ih,iw,cout,oh,ow)
    return jnp.asarray(op.reshape(cin * h * w, cout * h * w).astype(np.float32))


def prepare_operators(params):
    """One-time transform of torch-layout parameters into kernel operands."""
    u1 = jnp.asarray(_upsample2x_operator(NC[0], HW, HW))     # (64, 256)
    u2 = jnp.asarray(_upsample2x_operator(NC[1], H1, H1))     # (256, 1024)
    c1 = _conv_operator(params["conv1_w"], H1, H1)            # (256, 256)
    c2 = _conv_operator(params["conv2_w"], H2, H2)            # (1024, 256)
    return {
        "w1t": params["fc1_w"].T, "b1": params["fc1_b"][None, :],
        "g1": params["bn1_g"][None, :], "be1": params["bn1_b"][None, :],
        "w2t": params["fc2_w"].T, "b2": params["fc2_b"][None, :],
        "g2": params["bn2_g"][None, :], "be2": params["bn2_b"][None, :],
        "m1": jnp.dot(u1, c1),                                    # upsample1 o conv1
        "cb1": jnp.repeat(params["conv1_b"], H1 * H1)[None, :],   # (1, 256)
        "m2": jnp.dot(u2, c2),                                    # upsample2 o conv2
        "cb2": jnp.repeat(params["conv2_b"], H2 * H2)[None, :],   # (1, 256)
    }


# ------------------------------ forward & params ------------------------------

def conv_cond_gen_forward(x, ops):
    B = x.shape[0]
    if B <= FUSED_MAX_BATCH:
        return fused_forward(x, ops)                                    # one kernel
    y = mlp_forward(x, ops["w1t"], ops["b1"], ops["g1"], ops["be1"],
                    ops["w2t"], ops["b2"], ops["g2"], ops["be2"])       # (B, 64)
    return generator_conv_path(y, ops["m1"], ops["cb1"], ops["m2"], ops["cb2"])


def init_params(key):
    """Parameters stored in PyTorch layouts: Linear (out,in), Conv2d (Cout,Cin,kh,kw)."""
    ks = jax.random.split(key, 8)
    p = {}
    p["fc1_w"] = 0.1 * jax.random.normal(ks[0], (D_HID, D_IN), jnp.float32)
    p["fc1_b"] = 0.01 * jax.random.normal(ks[1], (D_HID,), jnp.float32)
    p["bn1_g"] = jnp.ones((D_HID,), jnp.float32)
    p["bn1_b"] = jnp.zeros((D_HID,), jnp.float32)
    p["fc2_w"] = 0.1 * jax.random.normal(ks[2], (RESHAPE_SIZE, D_HID), jnp.float32)
    p["fc2_b"] = 0.01 * jax.random.normal(ks[3], (RESHAPE_SIZE,), jnp.float32)
    p["bn2_g"] = jnp.ones((RESHAPE_SIZE,), jnp.float32)
    p["bn2_b"] = jnp.zeros((RESHAPE_SIZE,), jnp.float32)
    p["conv1_w"] = 0.1 * jax.random.normal(ks[4], (NC[1], NC[0], KS[0], KS[0]), jnp.float32)
    p["conv1_b"] = 0.01 * jax.random.normal(ks[5], (NC[1],), jnp.float32)
    p["conv2_w"] = 0.1 * jax.random.normal(ks[6], (NC[2], NC[1], KS[1], KS[1]), jnp.float32)
    p["conv2_b"] = 0.01 * jax.random.normal(ks[7], (NC[2],), jnp.float32)
    return p


if __name__ == "__main__":
    key = jax.random.PRNGKey(0)
    pkey, xkey = jax.random.split(key)
    params = init_params(pkey)
    ops = prepare_operators(params)
    B = 2
    x = jax.random.normal(xkey, (B, D_CODE + N_LABELS), jnp.float32)   # code ++ one-hot
    out = jax.jit(conv_cond_gen_forward)(x, ops)
    out = jax.block_until_ready(out)
    assert out.shape == (B, N_FEATS), out.shape
    assert bool(jnp.all(jnp.isfinite(out)))
    assert bool(jnp.all((out > 0.0) & (out < 1.0)))     # sigmoid range
    print("KERNEL_OK")
</pallas_src>

<mosaic_0001>
module attributes {stable_mosaic.version = 11 : i64} {
  func.func @_fused_kernel(%arg0: memref<2x12xf32, #tpu.memory_space<vmem>>, %arg1: memref<12x32xf32, #tpu.memory_space<vmem>>, %arg2: memref<1x32xf32, #tpu.memory_space<vmem>>, %arg3: memref<1x32xf32, #tpu.memory_space<vmem>>, %arg4: memref<1x32xf32, #tpu.memory_space<vmem>>, %arg5: memref<32x64xf32, #tpu.memory_space<vmem>>, %arg6: memref<1x64xf32, #tpu.memory_space<vmem>>, %arg7: memref<1x64xf32, #tpu.memory_space<vmem>>, %arg8: memref<1x64xf32, #tpu.memory_space<vmem>>, %arg9: memref<64x256xf32, #tpu.memory_space<vmem>>, %arg10: memref<1x256xf32, #tpu.memory_space<vmem>>, %arg11: memref<256x256xf32, #tpu.memory_space<vmem>>, %arg12: memref<1x256xf32, #tpu.memory_space<vmem>>, %arg13: memref<2x256xf32, #tpu.memory_space<vmem>>) attributes {dimension_semantics = [], scalar_prefetch = 0 : i64, scratch_operands = 0 : i64, tpu.core_type = #tpu.core_type<tc>} {
    %c0 = arith.constant 0 : index
    %c0_0 = arith.constant 0 : index
    %0 = vector.load %arg0[%c0, %c0_0] : memref<2x12xf32, #tpu.memory_space<vmem>>, vector<2x12xf32>
    %c0_1 = arith.constant 0 : index
    %c0_2 = arith.constant 0 : index
    %1 = vector.load %arg1[%c0_1, %c0_2] : memref<12x32xf32, #tpu.memory_space<vmem>>, vector<12x32xf32>
    %cst = arith.constant dense<0.000000e+00> : vector<2x32xf32>
    %2 = tpu.matmul %0, %1, %cst {dimension_numbers = #tpu.dot_dimension_numbers<[1], [0], [0], [1], [0, 0, 1, 1], [], []>} : vector<2x12xf32>, vector<12x32xf32>, vector<2x32xf32> -> vector<2x32xf32>
    %c0_3 = arith.constant 0 : index
    %c0_4 = arith.constant 0 : index
    %3 = vector.load %arg2[%c0_3, %c0_4] : memref<1x32xf32, #tpu.memory_space<vmem>>, vector<1x32xf32>
    %4 = vector.broadcast %3 : vector<1x32xf32> to vector<2x32xf32>
    %5 = arith.addf %2, %4 : vector<2x32xf32>
    %c0_5 = arith.constant 0 : index
    %c0_6 = arith.constant 0 : index
    %6 = vector.load %arg3[%c0_5, %c0_6] : memref<1x32xf32, #tpu.memory_space<vmem>>, vector<1x32xf32>
    %c0_7 = arith.constant 0 : index
    %c0_8 = arith.constant 0 : index
    %7 = vector.load %arg4[%c0_7, %c0_8] : memref<1x32xf32, #tpu.memory_space<vmem>>, vector<1x32xf32>
    %cst_9 = arith.constant dense<0.000000e+00> : vector<32xf32>
    %8 = vector.multi_reduction <add>, %5, %cst_9 [0] : vector<2x32xf32> to vector<32xf32>
    %9 = vector.shape_cast %8 : vector<32xf32> to vector<1x32xf32>
    %cst_10 = arith.constant 2.000000e+00 : f32
    %10 = vector.broadcast %cst_10 : f32 to vector<1x32xf32>
    %11 = arith.divf %9, %10 : vector<1x32xf32>
    %12 = vector.broadcast %11 : vector<1x32xf32> to vector<2x32xf32>
    %13 = arith.subf %5, %12 : vector<2x32xf32>
    %14 = arith.mulf %13, %13 : vector<2x32xf32>
    %cst_11 = arith.constant dense<0.000000e+00> : vector<32xf32>
    %15 = vector.multi_reduction <add>, %14, %cst_11 [0] : vector<2x32xf32> to vector<32xf32>
    %16 = vector.shape_cast %15 : vector<32xf32> to vector<1x32xf32>
    %cst_12 = arith.constant 2.000000e+00 : f32
    %17 = vector.broadcast %cst_12 : f32 to vector<1x32xf32>
    %18 = arith.divf %16, %17 : vector<1x32xf32>
    %19 = vector.broadcast %11 : vector<1x32xf32> to vector<2x32xf32>
    %20 = arith.subf %5, %19 : vector<2x32xf32>
    %cst_13 = arith.constant 9.99999974E-6 : f32
    %21 = vector.broadcast %cst_13 : f32 to vector<1x32xf32>
    %22 = arith.addf %18, %21 : vector<1x32xf32>
    %23 = math.rsqrt %22 : vector<1x32xf32>
    %24 = vector.broadcast %23 : vector<1x32xf32> to vector<2x32xf32>
    %25 = arith.mulf %20, %24 : vector<2x32xf32>
    %26 = vector.broadcast %6 : vector<1x32xf32> to vector<2x32xf32>
    %27 = arith.mulf %25, %26 : vector<2x32xf32>
    %28 = vector.broadcast %7 : vector<1x32xf32> to vector<2x32xf32>
    %29 = arith.addf %27, %28 : vector<2x32xf32>
    %cst_14 = arith.constant 0.000000e+00 : f32
    %30 = vector.broadcast %cst_14 : f32 to vector<2x32xf32>
    %31 = arith.maximumf %29, %30 : vector<2x32xf32>
    %c0_15 = arith.constant 0 : index
    %c0_16 = arith.constant 0 : index
    %32 = vector.load %arg5[%c0_15, %c0_16] : memref<32x64xf32, #tpu.memory_space<vmem>>, vector<32x64xf32>
    %cst_17 = arith.constant dense<0.000000e+00> : vector<2x64xf32>
    %33 = tpu.matmul %31, %32, %cst_17 {dimension_numbers = #tpu.dot_dimension_numbers<[1], [0], [0], [1], [0, 0, 1, 1], [], []>} : vector<2x32xf32>, vector<32x64xf32>, vector<2x64xf32> -> vector<2x64xf32>
    %c0_18 = arith.constant 0 : index
    %c0_19 = arith.constant 0 : index
    %34 = vector.load %arg6[%c0_18, %c0_19] : memref<1x64xf32, #tpu.memory_space<vmem>>, vector<1x64xf32>
    %35 = vector.broadcast %34 : vector<1x64xf32> to vector<2x64xf32>
    %36 = arith.addf %33, %35 : vector<2x64xf32>
    %c0_20 = arith.constant 0 : index
    %c0_21 = arith.constant 0 : index
    %37 = vector.load %arg7[%c0_20, %c0_21] : memref<1x64xf32, #tpu.memory_space<vmem>>, vector<1x64xf32>
    %c0_22 = arith.constant 0 : index
    %c0_23 = arith.constant 0 : index
    %38 = vector.load %arg8[%c0_22, %c0_23] : memref<1x64xf32, #tpu.memory_space<vmem>>, vector<1x64xf32>
    %cst_24 = arith.constant dense<0.000000e+00> : vector<64xf32>
    %39 = vector.multi_reduction <add>, %36, %cst_24 [0] : vector<2x64xf32> to vector<64xf32>
    %40 = vector.shape_cast %39 : vector<64xf32> to vector<1x64xf32>
    %cst_25 = arith.constant 2.000000e+00 : f32
    %41 = vector.broadcast %cst_25 : f32 to vector<1x64xf32>
    %42 = arith.divf %40, %41 : vector<1x64xf32>
    %43 = vector.broadcast %42 : vector<1x64xf32> to vector<2x64xf32>
    %44 = arith.subf %36, %43 : vector<2x64xf32>
    %45 = arith.mulf %44, %44 : vector<2x64xf32>
    %cst_26 = arith.constant dense<0.000000e+00> : vector<64xf32>
    %46 = vector.multi_reduction <add>, %45, %cst_26 [0] : vector<2x64xf32> to vector<64xf32>
    %47 = vector.shape_cast %46 : vector<64xf32> to vector<1x64xf32>
    %cst_27 = arith.constant 2.000000e+00 : f32
    %48 = vector.broadcast %cst_27 : f32 to vector<1x64xf32>
    %49 = arith.divf %47, %48 : vector<1x64xf32>
    %50 = vector.broadcast %42 : vector<1x64xf32> to vector<2x64xf32>
    %51 = arith.subf %36, %50 : vector<2x64xf32>
    %cst_28 = arith.constant 9.99999974E-6 : f32
    %52 = vector.broadcast %cst_28 : f32 to vector<1x64xf32>
    %53 = arith.addf %49, %52 : vector<1x64xf32>
    %54 = math.rsqrt %53 : vector<1x64xf32>
    %55 = vector.broadcast %54 : vector<1x64xf32> to vector<2x64xf32>
    %56 = arith.mulf %51, %55 : vector<2x64xf32>
    %57 = vector.broadcast %37 : vector<1x64xf32> to vector<2x64xf32>
    %58 = arith.mulf %56, %57 : vector<2x64xf32>
    %59 = vector.broadcast %38 : vector<1x64xf32> to vector<2x64xf32>
    %60 = arith.addf %58, %59 : vector<2x64xf32>
    %c0_29 = arith.constant 0 : index
    %c0_30 = arith.constant 0 : index
    %61 = vector.load %arg9[%c0_29, %c0_30] : memref<64x256xf32, #tpu.memory_space<vmem>>, vector<64x256xf32>
    %cst_31 = arith.constant dense<0.000000e+00> : vector<2x256xf32>
    %62 = tpu.matmul %60, %61, %cst_31 {dimension_numbers = #tpu.dot_dimension_numbers<[1], [0], [0], [1], [0, 0, 1, 1], [], []>} : vector<2x64xf32>, vector<64x256xf32>, vector<2x256xf32> -> vector<2x256xf32>
    %c0_32 = arith.constant 0 : index
    %c0_33 = arith.constant 0 : index
    %63 = vector.load %arg10[%c0_32, %c0_33] : memref<1x256xf32, #tpu.memory_space<vmem>>, vector<1x256xf32>
    %64 = vector.broadcast %63 : vector<1x256xf32> to vector<2x256xf32>
    %65 = arith.addf %62, %64 : vector<2x256xf32>
    %cst_34 = arith.constant 0.000000e+00 : f32
    %66 = vector.broadcast %cst_34 : f32 to vector<2x256xf32>
    %67 = arith.maximumf %65, %66 : vector<2x256xf32>
    %c0_35 = arith.constant 0 : index
    %c0_36 = arith.constant 0 : index
    %68 = vector.load %arg11[%c0_35, %c0_36] : memref<256x256xf32, #tpu.memory_space<vmem>>, vector<256x256xf32>
    %cst_37 = arith.constant dense<0.000000e+00> : vector<2x256xf32>
    %69 = tpu.matmul %67, %68, %cst_37 {dimension_numbers = #tpu.dot_dimension_numbers<[1], [0], [0], [1], [0, 0, 1, 1], [], []>} : vector<2x256xf32>, vector<256x256xf32>, vector<2x256xf32> -> vector<2x256xf32>
    %c0_38 = arith.constant 0 : index
    %c0_39 = arith.constant 0 : index
    %70 = vector.load %arg12[%c0_38, %c0_39] : memref<1x256xf32, #tpu.memory_space<vmem>>, vector<1x256xf32>
    %71 = vector.broadcast %70 : vector<1x256xf32> to vector<2x256xf32>
    %72 = arith.addf %69, %71 : vector<2x256xf32>
    %cst_40 = arith.constant 0.000000e+00 : f32
    %73 = vector.broadcast %cst_40 : f32 to vector<2x256xf32>
    %74 = arith.subf %73, %72 : vector<2x256xf32>
    %75 = math.exp %74 : vector<2x256xf32>
    %cst_41 = arith.constant 1.000000e+00 : f32
    %76 = vector.broadcast %cst_41 : f32 to vector<2x256xf32>
    %77 = arith.addf %76, %75 : vector<2x256xf32>
    %78 = tpu.reciprocal %77 {approx = true} : vector<2x256xf32> -> vector<2x256xf32>
    %c0_42 = arith.constant 0 : index
    %c0_43 = arith.constant 0 : index
    %79 = vector.load %arg13[%c0_42, %c0_43] : memref<2x256xf32, #tpu.memory_space<vmem>>, vector<2x256xf32>
    tpu.vector_store %arg13[%c0_42, %c0_43], %78 {strides = array<i32>} : memref<2x256xf32, #tpu.memory_space<vmem>>, vector<2x256xf32>,
    return
  }
}

</mosaic_0001>

<llo_original>
// kernel: conv_cond_gen_forward.1
$region0: #{conv_cond_gen_forward.1}
  #allocation0 [shape = 'u32[]', space=smem, size = 0x4, offset = 0x4, fixed_abs, tag = 'smem constant byte address 0x4 - core index']
  #allocation1 [shape = 'u32[144,128]{1,0:T(1,128)}', space=vmem, size = 0x12000, scoped, tag = 'internal scratch']
  %s0 = inlined_call_operand.hbm [shape: f32[2,12], index: 0, kind: input, shape index: {}]
  %s1 = inlined_call_operand.hbm [shape: f32[12,32], index: 1, kind: input, shape index: {}]
  %s2 = inlined_call_operand.vmem [shape: f32[1,32], index: 2, kind: input, shape index: {}]
  %s3 = inlined_call_operand.vmem [shape: f32[1,32], index: 3, kind: input, shape index: {}]
  %s4 = inlined_call_operand.vmem [shape: f32[1,32], index: 4, kind: input, shape index: {}]
  %s5 = inlined_call_operand.vmem [shape: f32[32,64], index: 5, kind: input, shape index: {}]
  %s6 = inlined_call_operand.hbm [shape: f32[1,64], index: 6, kind: input, shape index: {}]
  %s7 = inlined_call_operand.vmem [shape: f32[1,64], index: 7, kind: input, shape index: {}]
  %s8 = inlined_call_operand.vmem [shape: f32[1,64], index: 8, kind: input, shape index: {}]
  %s9 = inlined_call_operand.hbm [shape: f32[64,256], index: 9, kind: input, shape index: {}]
  %s10 = inlined_call_operand.vmem [shape: f32[1,256], index: 10, kind: input, shape index: {}]
  %s11 = inlined_call_operand.hbm [shape: f32[256,256], index: 11, kind: input, shape index: {}]
  %s12 = inlined_call_operand.vmem [shape: f32[1,256], index: 12, kind: input, shape index: {}]
  %s13 = inlined_call_operand.hbm [shape: f32[2,256], index: 13, kind: output, shape index: {}]
  %s14 = sld [smem:[#allocation0]]
  $region82: #{conv_cond_gen_forward.1} parent=0
    _
  %s16 = ssub.s32 1, %s14
  %s17 = scalar_select 0, %s16, %s14
  $region1: #{conv_cond_gen_forward.1} parent=0
    #allocation2 [shape = 'u8[1024]{0}', space=vmem, size = 0x400, scoped, tag = 'input window, operand 0, single buffered']
    #allocation3 [shape = 's32[1]{0}', space=sflag, size = 0x4, scoped, tag = 'scoped memory for conv_cond_gen_forward.1']
    #allocation4 [shape = 's32[1]{0}', space=sflag, size = 0x4, scoped, tag = 'scoped memory for conv_cond_gen_forward.1']
    #allocation5 [shape = 'u8[8192]{0}', space=vmem, size = 0x2000, scoped, tag = 'input window, operand 1, single buffered']
    #allocation6 [shape = 's32[1]{0}', space=sflag, size = 0x4, scoped, tag = 'scoped memory for conv_cond_gen_forward.1']
    #allocation7 [shape = 'u8[512]{0}', space=vmem, size = 0x400, scoped, tag = 'input window, operand 6, single buffered']
    #allocation8 [shape = 'u8[65536]{0}', space=vmem, size = 0x10000, scoped, tag = 'input window, operand 9, single buffered']
    #allocation9 [shape = 's32[1]{0}', space=sflag, size = 0x4, scoped, tag = 'scoped memory for conv_cond_gen_forward.1']
    #allocation10 [shape = 'u8[262144]{0}', space=vmem, size = 0x40000, scoped, tag = 'input window, operand 11, single buffered']
    #allocation11 [shape = 'u8[2048]{0}', space=vmem, size = 0x800, scoped, tag = 'output window, operand 0, single buffered']
    %18 = vsyncpa [#allocation3], 0
    %19 = vsyncpa [#allocation6], 0
    %20 = vsyncpa [#allocation9], 0
    %21 = vsyncpa [#allocation4], 0
    // Predicated region
    $region2: #{conv_cond_gen_forward.1} parent=1 // pred_check
      _
    $region3: #{conv_cond_gen_forward.1} parent=1 // pred_check_branch
      %23 = sbr.rel (0) target = $region5
    $region4: #{conv_cond_gen_forward.1} parent=1 // pred_region
      %s25 = ssub.s32 32, 32
      %26 = vsyncadd [#allocation3], %s25
      %s28 = sshll.u32 [#allocation2], 4
      %s29 = int_to_ptr.vmem [resolvable:$true] %s28
      %31 = dma.hbm_to_vmem [thread:$0]  %s0, 32, %s29, [#allocation3]
    $region5: #{conv_cond_gen_forward.1} parent=1 // pred_fallthru
      _
    // Predicated region
    $region6: #{conv_cond_gen_forward.1} parent=1 // pred_check
      _
    $region7: #{conv_cond_gen_forward.1} parent=1 // pred_check_branch
      %33 = sbr.rel (0) target = $region9
    $region8: #{conv_cond_gen_forward.1} parent=1 // pred_region
      %s35 = ssub.s32 256, 256
      %36 = vsyncadd [#allocation6], %s35
      %s37 = sshll.u32 [#allocation5], 4
      %s38 = int_to_ptr.vmem [resolvable:$true] %s37
      %43 = dma.hbm_to_vmem [thread:$0]  %s1, 256, %s38, [#allocation6], 128, 128, 8
    $region9: #{conv_cond_gen_forward.1} parent=1 // pred_fallthru
      _
    // Predicated region
    $region10: #{conv_cond_gen_forward.1} parent=1 // pred_check
      _
    $region11: #{conv_cond_gen_forward.1} parent=1 // pred_check_branch
      %45 = sbr.rel (0) target = $region13
    $region12: #{conv_cond_gen_forward.1} parent=1 // pred_region
      _
    $region13: #{conv_cond_gen_forward.1} parent=1 // pred_fallthru
      _
    // Predicated region
    $region14: #{conv_cond_gen_forward.1} parent=1 // pred_check
      _
    $region15: #{conv_cond_gen_forward.1} parent=1 // pred_check_branch
      %47 = sbr.rel (0) target = $region17
    $region16: #{conv_cond_gen_forward.1} parent=1 // pred_region
      _
    $region17: #{conv_cond_gen_forward.1} parent=1 // pred_fallthru
      _
    // Predicated region
    $region18: #{conv_cond_gen_forward.1} parent=1 // pred_check
      _
    $region19: #{conv_cond_gen_forward.1} parent=1 // pred_check_branch
      %49 = sbr.rel (0) target = $region21
    $region20: #{conv_cond_gen_forward.1} parent=1 // pred_region
      _
    $region21: #{conv_cond_gen_forward.1} parent=1 // pred_fallthru
      _
    // Predicated region
    $region22: #{conv_cond_gen_forward.1} parent=1 // pred_check
      _
    $region23: #{conv_cond_gen_forward.1} parent=1 // pred_check_branch
      %51 = sbr.rel (0) target = $region25
    $region24: #{conv_cond_gen_forward.1} parent=1 // pred_region
      _
    $region25: #{conv_cond_gen_forward.1} parent=1 // pred_fallthru
      _
    // Predicated region
    $region26: #{conv_cond_gen_forward.1} parent=1 // pred_check
      _
    $region27: #{conv_cond_gen_forward.1} parent=1 // pred_check_branch
      %53 = sbr.rel (0) target = $region29
    $region28: #{conv_cond_gen_forward.1} parent=1 // pred_region
      %s55 = ssub.s32 16, 16
      %56 = vsyncadd [#allocation6], %s55
      %s58 = sshll.u32 [#allocation7], 4
      %s59 = int_to_ptr.vmem [resolvable:$true] %s58
      %61 = dma.hbm_to_vmem [thread:$0]  %s6, 16, %s59, [#allocation6]
    $region29: #{conv_cond_gen_forward.1} parent=1 // pred_fallthru
      _
    // Predicated region
    $region30: #{conv_cond_gen_forward.1} parent=1 // pred_check
      _
    $region31: #{conv_cond_gen_forward.1} parent=1 // pred_check_branch
      %63 = sbr.rel (0) target = $region33
    $region32: #{conv_cond_gen_forward.1} parent=1 // pred_region
      _
    $region33: #{conv_cond_gen_forward.1} parent=1 // pred_fallthru
      _
    // Predicated region
    $region34: #{conv_cond_gen_forward.1} parent=1 // pred_check
      _
    $region35: #{conv_cond_gen_forward.1} parent=1 // pred_check_branch
      %65 = sbr.rel (0) target = $region37
    $region36: #{conv_cond_gen_forward.1} parent=1 // pred_region
      _
    $region37: #{conv_cond_gen_forward.1} parent=1 // pred_fallthru
      _
    // Predicated region
    $region38: #{conv_cond_gen_forward.1} parent=1 // pred_check
      _
    $region39: #{conv_cond_gen_forward.1} parent=1 // pred_check_branch
      %67 = sbr.rel (0) target = $region41
    $region40: #{conv_cond_gen_forward.1} parent=1 // pred_region
      %s69 = ssub.s32 2048, 2048
      %70 = vsyncadd [#allocation9], %s69
      %s71 = sshll.u32 [#allocation8], 4
      %s72 = int_to_ptr.vmem [resolvable:$true] %s71
      %77 = dma.hbm_to_vmem [thread:$0]  %s9, 2048, %s72, [#allocation9], 256, 256, 16
    $region41: #{conv_cond_gen_forward.1} parent=1 // pred_fallthru
      _
    // Predicated region
    $region42: #{conv_cond_gen_forward.1} parent=1 // pred_check
      _
    $region43: #{conv_cond_gen_forward.1} parent=1 // pred_check_branch
      %79 = sbr.rel (0) target = $region45
    $region44: #{conv_cond_gen_forward.1} parent=1 // pred_region
      _
    $region45: #{conv_cond_gen_forward.1} parent=1 // pred_fallthru
      _
    // Predicated region
    $region46: #{conv_cond_gen_forward.1} parent=1 // pred_check
      _
    $region47: #{conv_cond_gen_forward.1} parent=1 // pred_check_branch
      %81 = sbr.rel (0) target = $region49
    $region48: #{conv_cond_gen_forward.1} parent=1 // pred_region
      %s83 = ssub.s32 8192, 8192
      %84 = vsyncadd [#allocation9], %s83
      %s85 = sshll.u32 [#allocation10], 4
      %s86 = int_to_ptr.vmem [resolvable:$true] %s85
      %91 = dma.hbm_to_vmem [thread:$0]  %s11, 8192, %s86, [#allocation9], 256, 256, 16
    $region49: #{conv_cond_gen_forward.1} parent=1 // pred_fallthru
      _
    // Predicated region
    $region50: #{conv_cond_gen_forward.1} parent=1 // pred_check
      _
    $region51: #{conv_cond_gen_forward.1} parent=1 // pred_check_branch
      %93 = sbr.rel (0) target = $region53
    $region52: #{conv_cond_gen_forward.1} parent=1 // pred_region
      _
    $region53: #{conv_cond_gen_forward.1} parent=1 // pred_fallthru
      _
    // Predicated region
    $region54: #{conv_cond_gen_forward.1} parent=1 // pred_check
      _
    $region55: #{conv_cond_gen_forward.1} parent=1 // pred_check_branch
      %95 = sbr.rel (0) target = $region57
    $region56: #{conv_cond_gen_forward.1} parent=1 // pred_region
      %96 = dma.done [#allocation3], 32
    $region57: #{conv_cond_gen_forward.1} parent=1 // pred_fallthru
      _
    // Predicated region
    $region58: #{conv_cond_gen_forward.1} parent=1 // pred_check
      _
    $region59: #{conv_cond_gen_forward.1} parent=1 // pred_check_branch
      %98 = sbr.rel (0) target = $region61
    $region60: #{conv_cond_gen_forward.1} parent=1 // pred_region
      %99 = dma.done [#allocation6], 256
    $region61: #{conv_cond_gen_forward.1} parent=1 // pred_fallthru
      _
    // Predicated region
    $region62: #{conv_cond_gen_forward.1} parent=1 // pred_check
      _
    $region63: #{conv_cond_gen_forward.1} parent=1 // pred_check_branch
      %101 = sbr.rel (0) target = $region65
    $region64: #{conv_cond_gen_forward.1} parent=1 // pred_region
      %102 = dma.done [#allocation6], 16
    $region65: #{conv_cond_gen_forward.1} parent=1 // pred_fallthru
      _
    // Predicated region
    $region66: #{conv_cond_gen_forward.1} parent=1 // pred_check
      _
    $region67: #{conv_cond_gen_forward.1} parent=1 // pred_check_branch
      %104 = sbr.rel (0) target = $region69
    $region68: #{conv_cond_gen_forward.1} parent=1 // pred_region
      %105 = dma.done [#allocation9], 2048
    $region69: #{conv_cond_gen_forward.1} parent=1 // pred_fallthru
      _
    // Predicated region
    $region70: #{conv_cond_gen_forward.1} parent=1 // pred_check
      _
    $region71: #{conv_cond_gen_forward.1} parent=1 // pred_check_branch
      %107 = sbr.rel (0) target = $region73
    $region72: #{conv_cond_gen_forward.1} parent=1 // pred_region
      %108 = dma.done [#allocation9], 8192
    $region73: #{conv_cond_gen_forward.1} parent=1 // pred_fallthru
      _
    %v109 = vld [vmem:[#allocation2] sm:$0x3]
    %v110 = vld [vmem:[#allocation5] sm:$0xff]
    %v111 = vld [vmem:[#allocation5 + $0x8] sm:$0xf]
    %v112 = vld [vmem:[%s2] sm:$0x1]
    %v114 = vlaneseq
    %v115 = vshrl.u32 %v114, 7
    %v116 = vsub.s32 0, %v115
    %v117 = vrot.slane %v112, %v116
    %vm119 = vcmask 97280
    %v121 = vsel %vm119, %v109, 0
    %vm123 = vcmask 1043456
    %v125 = vsel %vm123, %v111, 0
    %127 = vmatprep.subr.mxu0 0.0
    %128 = vmatpush1.msra.mxu0 %v110
    %129 = vmatprep.subr.mxu0 0.0
    %130 = vmatpush1.msra.mxu0 %v125
    %131 = vmatprep.subr.mxu0 0.0
    %132 = vmatpush1.msra.mxu0 0.0
    %133 = vmatprep.subr.mxu0 0.0
    %134 = vmatpush1.msra.mxu0 0.0
    %135 = vmatprep.subr.mxu0 0.0
    %136 = vmatpush1.msra.mxu0 0.0
    %137 = vmatprep.subr.mxu0 0.0
    %138 = vmatpush1.msra.mxu0 0.0
    %139 = vmatprep.subr.mxu0 0.0
    %140 = vmatpush1.msra.mxu0 0.0
    %141 = vmatprep.subr.mxu0 0.0
    %142 = vmatpush1.msra.mxu0 0.0
    %143 = vmatprep.subr.mxu0 0.0
    %144 = vmatpush1.msra.mxu0 0.0
    %145 = vmatprep.subr.mxu0 0.0
    %146 = vmatpush1.msra.mxu0 0.0
    %147 = vmatprep.subr.mxu0 0.0
    %148 = vmatpush1.msra.mxu0 0.0
    %149 = vmatprep.subr.mxu0 0.0
    %150 = vmatpush1.msra.mxu0 0.0
    %151 = vmatprep.subr.mxu0 0.0
    %152 = vmatpush1.msra.mxu0 0.0
    %153 = vmatprep.subr.mxu0 0.0
    %154 = vmatpush1.msra.mxu0 0.0
    %155 = vmatprep.subr.mxu0 0.0
    %156 = vmatpush1.msra.mxu0 0.0
    %157 = vmatprep.subr.mxu0 0.0
    %158 = vmatpush1.msra.mxu0 0.0
    %159 = vmatprep.subr.mxu0 0.0
    %160 = vmatpush1.msra.mxu0 0.0
    %161 = vmatprep.subr.mxu0 0.0
    %162 = vmatpush1.msra.mxu0 0.0
    %163 = vmatprep.subr.mxu0 0.0
    %164 = vmatpush1.msra.mxu0 0.0
    %165 = vmatprep.subr.mxu0 0.0
    %166 = vmatpush1.msra.mxu0 0.0
    %167 = vmatprep.subr.mxu0 0.0
    %168 = vmatpush1.msra.mxu0 0.0
    %169 = vmatprep.subr.mxu0 0.0
    %170 = vmatpush1.msra.mxu0 0.0
    %171 = vmatprep.subr.mxu0 0.0
    %172 = vmatpush1.msra.mxu0 0.0
    %173 = vmatprep.subr.mxu0 0.0
    %174 = vmatpush1.msra.mxu0 0.0
    %175 = vmatprep.subr.mxu0 0.0
    %176 = vmatpush1.msra.mxu0 0.0
    %177 = vmatprep.subr.mxu0 0.0
    %178 = vmatpush1.msra.mxu0 0.0
    %179 = vmatprep.subr.mxu0 0.0
    %180 = vmatpush1.msra.mxu0 0.0
    %181 = vmatprep.subr.mxu0 0.0
    %182 = vmatpush1.msra.mxu0 0.0
    %183 = vmatprep.subr.mxu0 0.0
    %184 = vmatpush1.msra.mxu0 0.0
    %185 = vmatprep.subr.mxu0 0.0
    %186 = vmatpush1.msra.mxu0 0.0
    %187 = vmatprep.subr.mxu0 0.0
    %188 = vmatpush1.msra.mxu0 0.0
    %189 = vmatprep.subr.mxu0 0.0
    %190 = vmatpush1.msra.mxu0 0.0
    %191 = vmatprep.mubr.f32.mxu0 0.0
    %192 = vmatmul.mubr.f32.gmra.mrb[0].mxu0 %v121
    %v193 = vpop.f32.mrb[0].mxu0
    %v194 = vadd.f32 %v117, %v193
    %v195 = vpop.f32.mrb[0].mxu0
    %196 = vdwg.mxu0
    %v197 = vld [vmem:[%s3] sm:$0x1]
    %v198 = vld [vmem:[%s4] sm:$0x1]
    %vm199 = vcmask 254976
    %v200 = vsel %vm199, %v194, 0.0
    %v201 = vrot.slane %v200, 4
    %v202 = vadd.f32 %v200, %v201
    %v203 = vrot.slane %v202, 2
    %v204 = vadd.f32 %v202, %v203
    %v205 = vrot.slane %v204, 1
    %v206 = vadd.f32 %v204, %v205
    %v207 = vrcp.pop 2.0
    %v208 = vmul.f32 %v206, %v207
    %v209 = vsub.f32 %v194, %v208
    %v210 = vmul.f32 %v209, %v209
    %v211 = vsel %vm199, %v210, 0.0
    %v212 = vrot.slane %v211, 4
    %v213 = vadd.f32 %v211, %v212
    %v214 = vrot.slane %v213, 2
    %v215 = vadd.f32 %v213, %v214
    %v216 = vrot.slane %v215, 1
    %v217 = vadd.f32 %v215, %v216
    %v218 = vmul.f32 %v217, %v207
    %v219 = vadd.f32 %v218, 1e-05
    %v220 = vrsqrt.pop %v219
    %v221 = vmul.f32 %v209, %v220
    %v223 = vlaneseq
    %v224 = vshrl.u32 %v223, 7
    %v225 = vsub.s32 0, %v224
    %v226 = vrot.slane %v197, %v225
    %v228 = vmul.f32 %v221, %v226
    %v230 = vlaneseq
    %v231 = vshrl.u32 %v230, 7
    %v232 = vsub.s32 0, %v231
    %v233 = vrot.slane %v198, %v232
    %v235 = vadd.f32 %v228, %v233
    %v236 = vmax.f32 %v235, 0.0
    %v237 = vld [vmem:[%s5] sm:$0xff]
    %v238 = vld [vmem:[%s5 + $0x8] sm:$0xff]
    %v239 = vld [vmem:[%s5 + $0x10] sm:$0xff]
    %v240 = vld [vmem:[%s5 + $0x18] sm:$0xff]
    %v241 = vld [vmem:[#allocation7] sm:$0x1]
    %v243 = vlaneseq
    %v244 = vshrl.u32 %v243, 7
    %v245 = vsub.s32 0, %v244
    %v246 = vrot.slane %v241, %v245
    %vm248 = vcmask 261120
    %v250 = vsel %vm248, %v236, 0
    %252 = vmatprep.subr.mxu0 0.0
    %253 = vmatpush1.msra.mxu0 %v237
    %254 = vmatprep.subr.mxu0 0.0
    %255 = vmatpush1.msra.mxu0 %v238
    %256 = vmatprep.subr.mxu0 0.0
    %257 = vmatpush1.msra.mxu0 %v239
    %258 = vmatprep.subr.mxu0 0.0
    %259 = vmatpush1.msra.mxu0 %v240
    %260 = vmatprep.subr.mxu0 0.0
    %261 = vmatpush1.msra.mxu0 0.0
    %262 = vmatprep.subr.mxu0 0.0
    %263 = vmatpush1.msra.mxu0 0.0
    %264 = vmatprep.subr.mxu0 0.0
    %265 = vmatpush1.msra.mxu0 0.0
    %266 = vmatprep.subr.mxu0 0.0
    %267 = vmatpush1.msra.mxu0 0.0
    %268 = vmatprep.subr.mxu0 0.0
    %269 = vmatpush1.msra.mxu0 0.0
    %270 = vmatprep.subr.mxu0 0.0
    %271 = vmatpush1.msra.mxu0 0.0
    %272 = vmatprep.subr.mxu0 0.0
    %273 = vmatpush1.msra.mxu0 0.0
    %274 = vmatprep.subr.mxu0 0.0
    %275 = vmatpush1.msra.mxu0 0.0
    %276 = vmatprep.subr.mxu0 0.0
    %277 = vmatpush1.msra.mxu0 0.0
    %278 = vmatprep.subr.mxu0 0.0
    %279 = vmatpush1.msra.mxu0 0.0
    %280 = vmatprep.subr.mxu0 0.0
    %281 = vmatpush1.msra.mxu0 0.0
    %282 = vmatprep.subr.mxu0 0.0
    %283 = vmatpush1.msra.mxu0 0.0
    %284 = vmatprep.subr.mxu0 0.0
    %285 = vmatpush1.msra.mxu0 0.0
    %286 = vmatprep.subr.mxu0 0.0
    %287 = vmatpush1.msra.mxu0 0.0
    %288 = vmatprep.subr.mxu0 0.0
    %289 = vmatpush1.msra.mxu0 0.0
    %290 = vmatprep.subr.mxu0 0.0
    %291 = vmatpush1.msra.mxu0 0.0
    %292 = vmatprep.subr.mxu0 0.0
    %293 = vmatpush1.msra.mxu0 0.0
    %294 = vmatprep.subr.mxu0 0.0
    %295 = vmatpush1.msra.mxu0 0.0
    %296 = vmatprep.subr.mxu0 0.0
    %297 = vmatpush1.msra.mxu0 0.0
    %298 = vmatprep.subr.mxu0 0.0
    %299 = vmatpush1.msra.mxu0 0.0
    %300 = vmatprep.subr.mxu0 0.0
    %301 = vmatpush1.msra.mxu0 0.0
    %302 = vmatprep.subr.mxu0 0.0
    %303 = vmatpush1.msra.mxu0 0.0
    %304 = vmatprep.subr.mxu0 0.0
    %305 = vmatpush1.msra.mxu0 0.0
    %306 = vmatprep.subr.mxu0 0.0
    %307 = vmatpush1.msra.mxu0 0.0
    %308 = vmatprep.subr.mxu0 0.0
    %309 = vmatpush1.msra.mxu0 0.0
    %310 = vmatprep.subr.mxu0 0.0
    %311 = vmatpush1.msra.mxu0 0.0
    %312 = vmatprep.subr.mxu0 0.0
    %313 = vmatpush1.msra.mxu0 0.0
    %314 = vmatprep.subr.mxu0 0.0
    %315 = vmatpush1.msra.mxu0 0.0
    %316 = vmatprep.mubr.f32.mxu0 0.0
    %317 = vmatmul.mubr.f32.gmra.mrb[0].mxu0 %v250
    %v318 = vpop.f32.mrb[0].mxu0
    %v319 = vadd.f32 %v246, %v318
    %v320 = vpop.f32.mrb[0].mxu0
    %321 = vdwg.mxu0
    %v322 = vld [vmem:[%s7] sm:$0x1]
    %v323 = vld [vmem:[%s8] sm:$0x1]
    %vm324 = vcmask 517120
    %v325 = vsel %vm324, %v319, 0.0
    %v326 = vrot.slane %v325, 4
    %v327 = vadd.f32 %v325, %v326
    %v328 = vrot.slane %v327, 2
    %v329 = vadd.f32 %v327, %v328
    %v330 = vrot.slane %v329, 1
    %v331 = vadd.f32 %v329, %v330
    %v332 = vmul.f32 %v331, %v207
    %v333 = vsub.f32 %v319, %v332
    %v334 = vmul.f32 %v333, %v333
    %v335 = vsel %vm324, %v334, 0.0
    %v336 = vrot.slane %v335, 4
    %v337 = vadd.f32 %v335, %v336
    %v338 = vrot.slane %v337, 2
    %v339 = vadd.f32 %v337, %v338
    %v340 = vrot.slane %v339, 1
    %v341 = vadd.f32 %v339, %v340
    %v342 = vmul.f32 %v341, %v207
    %v343 = vadd.f32 %v342, 1e-05
    %v344 = vrsqrt.pop %v343
    %v345 = vmul.f32 %v333, %v344
    %v347 = vlaneseq
    %v348 = vshrl.u32 %v347, 7
    %v349 = vsub.s32 0, %v348
    %v350 = vrot.slane %v322, %v349
    %v352 = vmul.f32 %v345, %v350
    %v354 = vlaneseq
    %v355 = vshrl.u32 %v354, 7
    %v356 = vsub.s32 0, %v355
    %v357 = vrot.slane %v323, %v356
    %v359 = vadd.f32 %v352, %v357
    %v360 = vld [vmem:[#allocation8] sm:$0xff]
    %v361 = vld [vmem:[#allocation8 + $0x8] sm:$0xff]
    %v362 = vld [vmem:[#allocation8 + $0x10] sm:$0xff]
    %v363 = vld [vmem:[#allocation8 + $0x18] sm:$0xff]
    %v364 = vld [vmem:[#allocation8 + $0x20] sm:$0xff]
    %v365 = vld [vmem:[#allocation8 + $0x28] sm:$0xff]
    %v366 = vld [vmem:[#allocation8 + $0x30] sm:$0xff]
    %v367 = vld [vmem:[#allocation8 + $0x38] sm:$0xff]
    %v368 = vld [vmem:[#allocation8 + $0x40] sm:$0xff]
    %v369 = vld [vmem:[#allocation8 + $0x48] sm:$0xff]
    %v370 = vld [vmem:[#allocation8 + $0x50] sm:$0xff]
    %v371 = vld [vmem:[#allocation8 + $0x58] sm:$0xff]
    %v372 = vld [vmem:[#allocation8 + $0x60] sm:$0xff]
    %v373 = vld [vmem:[#allocation8 + $0x68] sm:$0xff]
    %v374 = vld [vmem:[#allocation8 + $0x70] sm:$0xff]
    %v375 = vld [vmem:[#allocation8 + $0x78] sm:$0xff]
    %v376 = vld [vmem:[%s10] sm:$0x3]
    %v378 = vlaneseq
    %v379 = vshrl.u32 %v378, 7
    %v380 = vsub.s32 0, %v379
    %v381 = vrot.slane %v376, %v380
    %v382 = vlaneseq
    %v383 = vshrl.u32 %v382, 7
    %v384 = vsub.s32 1, %v383
    %v385 = vrot.slane %v376, %v384
    %vm388 = vcmask 523264
    %v390 = vsel %vm388, %v359, 0
    %392 = vmatprep.subr.mxu0 %v361
    %393 = vmatpush1.msra.mxu0 %v360
    %394 = vmatprep.subr.mxu0 %v363
    %395 = vmatpush1.msra.mxu0 %v362
    %396 = vmatprep.subr.mxu0 %v365
    %397 = vmatpush1.msra.mxu0 %v364
    %398 = vmatprep.subr.mxu0 %v367
    %399 = vmatpush1.msra.mxu0 %v366
    %400 = vmatprep.subr.mxu0 %v369
    %401 = vmatpush1.msra.mxu0 %v368
    %402 = vmatprep.subr.mxu0 %v371
    %403 = vmatpush1.msra.mxu0 %v370
    %404 = vmatprep.subr.mxu0 %v373
    %405 = vmatpush1.msra.mxu0 %v372
    %406 = vmatprep.subr.mxu0 %v375
    %407 = vmatpush1.msra.mxu0 %v374
    %408 = vmatprep.subr.mxu0 0.0
    %409 = vmatpush1.msra.mxu0 0.0
    %410 = vmatprep.subr.mxu0 0.0
    %411 = vmatpush1.msra.mxu0 0.0
    %412 = vmatprep.subr.mxu0 0.0
    %413 = vmatpush1.msra.mxu0 0.0
    %414 = vmatprep.subr.mxu0 0.0
    %415 = vmatpush1.msra.mxu0 0.0
    %416 = vmatprep.subr.mxu0 0.0
    %417 = vmatpush1.msra.mxu0 0.0
    %418 = vmatprep.subr.mxu0 0.0
    %419 = vmatpush1.msra.mxu0 0.0
    %420 = vmatprep.subr.mxu0 0.0
    %421 = vmatpush1.msra.mxu0 0.0
    %422 = vmatprep.subr.mxu0 0.0
    %423 = vmatpush1.msra.mxu0 0.0
    %424 = vmatprep.subr.mxu0 0.0
    %425 = vmatpush1.msra.mxu0 0.0
    %426 = vmatprep.subr.mxu0 0.0
    %427 = vmatpush1.msra.mxu0 0.0
    %428 = vmatprep.subr.mxu0 0.0
    %429 = vmatpush1.msra.mxu0 0.0
    %430 = vmatprep.subr.mxu0 0.0
    %431 = vmatpush1.msra.mxu0 0.0
    %432 = vmatprep.subr.mxu0 0.0
    %433 = vmatpush1.msra.mxu0 0.0
    %434 = vmatprep.subr.mxu0 0.0
    %435 = vmatpush1.msra.mxu0 0.0
    %436 = vmatprep.subr.mxu0 0.0
    %437 = vmatpush1.msra.mxu0 0.0
    %438 = vmatprep.subr.mxu0 0.0
    %439 = vmatpush1.msra.mxu0 0.0
    %440 = vmatprep.subr.mxu0 0.0
    %441 = vmatpush1.msra.mxu0 0.0
    %442 = vmatprep.subr.mxu0 0.0
    %443 = vmatpush1.msra.mxu0 0.0
    %444 = vmatprep.subr.mxu0 0.0
    %445 = vmatpush1.msra.mxu0 0.0
    %446 = vmatprep.subr.mxu0 0.0
    %447 = vmatpush1.msra.mxu0 0.0
    %448 = vmatprep.subr.mxu0 0.0
    %449 = vmatpush1.msra.mxu0 0.0
    %450 = vmatprep.subr.mxu0 0.0
    %451 = vmatpush1.msra.mxu0 0.0
    %452 = vmatprep.subr.mxu0 0.0
    %453 = vmatpush1.msra.mxu0 0.0
    %454 = vmatprep.subr.mxu0 0.0
    %455 = vmatpush1.msra.mxu0 0.0
    %456 = vmatprep.mubr.f32.mxu0 0.0
    %457 = vmatmul.mubr.f32.gmra.mrb[0].mxu0 %v390
    %v458 = vpop.f32.mrb[0].mxu0
    %v459 = vadd.f32 %v381, %v458
    %v460 = vpop.f32.mrb[0].mxu0
    %v461 = vadd.f32 %v385, %v460
    %462 = vdwg.mxu0
    %v463 = vmax.f32 %v459, 0.0
    %v464 = vmax.f32 %v461, 0.0
    %v465 = vld [vmem:[#allocation10] sm:$0xff]
    %v466 = vld [vmem:[#allocation10 + $0x8] sm:$0xff]
    %v467 = vld [vmem:[#allocation10 + $0x10] sm:$0xff]
    %v468 = vld [vmem:[#allocation10 + $0x18] sm:$0xff]
    %v469 = vld [vmem:[#allocation10 + $0x20] sm:$0xff]
    %v470 = vld [vmem:[#allocation10 + $0x28] sm:$0xff]
    %v471 = vld [vmem:[#allocation10 + $0x30] sm:$0xff]
    %v472 = vld [vmem:[#allocation10 + $0x38] sm:$0xff]
    %v473 = vld [vmem:[#allocation10 + $0x40] sm:$0xff]
    %v474 = vld [vmem:[#allocation10 + $0x48] sm:$0xff]
    %v475 = vld [vmem:[#allocation10 + $0x50] sm:$0xff]
    %v476 = vld [vmem:[#allocation10 + $0x58] sm:$0xff]
    %v477 = vld [vmem:[#allocation10 + $0x60] sm:$0xff]
    %v478 = vld [vmem:[#allocation10 + $0x68] sm:$0xff]
    %v479 = vld [vmem:[#allocation10 + $0x70] sm:$0xff]
    %v480 = vld [vmem:[#allocation10 + $0x78] sm:$0xff]
    %v481 = vld [vmem:[#allocation10 + $0x80] sm:$0xff]
    %v482 = vld [vmem:[#allocation10 + $0x88] sm:$0xff]
    %v483 = vld [vmem:[#allocation10 + $0x90] sm:$0xff]
    %v484 = vld [vmem:[#allocation10 + $0x98] sm:$0xff]
    %v485 = vld [vmem:[#allocation10 + $0xa0] sm:$0xff]
    %v486 = vld [vmem:[#allocation10 + $0xa8] sm:$0xff]
    %v487 = vld [vmem:[#allocation10 + $0xb0] sm:$0xff]
    %v488 = vld [vmem:[#allocation10 + $0xb8] sm:$0xff]
    %v489 = vld [vmem:[#allocation10 + $0xc0] sm:$0xff]
    %v490 = vld [vmem:[#allocation10 + $0xc8] sm:$0xff]
    %v491 = vld [vmem:[#allocation10 + $0xd0] sm:$0xff]
    %v492 = vld [vmem:[#allocation10 + $0xd8] sm:$0xff]
    %v493 = vld [vmem:[#allocation10 + $0xe0] sm:$0xff]
    %v494 = vld [vmem:[#allocation10 + $0xe8] sm:$0xff]
    %v495 = vld [vmem:[#allocation10 + $0xf0] sm:$0xff]
    %v496 = vld [vmem:[#allocation10 + $0xf8] sm:$0xff]
    %v497 = vld [vmem:[#allocation10 + $0x100] sm:$0xff]
    %v498 = vld [vmem:[#allocation10 + $0x108] sm:$0xff]
    %v499 = vld [vmem:[#allocation10 + $0x110] sm:$0xff]
    %v500 = vld [vmem:[#allocation10 + $0x118] sm:$0xff]
    %v501 = vld [vmem:[#allocation10 + $0x120] sm:$0xff]
    %v502 = vld [vmem:[#allocation10 + $0x128] sm:$0xff]
    %v503 = vld [vmem:[#allocation10 + $0x130] sm:$0xff]
    %v504 = vld [vmem:[#allocation10 + $0x138] sm:$0xff]
    %v505 = vld [vmem:[#allocation10 + $0x140] sm:$0xff]
    %v506 = vld [vmem:[#allocation10 + $0x148] sm:$0xff]
    %v507 = vld [vmem:[#allocation10 + $0x150] sm:$0xff]
    %v508 = vld [vmem:[#allocation10 + $0x158] sm:$0xff]
    %v509 = vld [vmem:[#allocation10 + $0x160] sm:$0xff]
    %v510 = vld [vmem:[#allocation10 + $0x168] sm:$0xff]
    %v511 = vld [vmem:[#allocation10 + $0x170] sm:$0xff]
    %v512 = vld [vmem:[#allocation10 + $0x178] sm:$0xff]
    %v513 = vld [vmem:[#allocation10 + $0x180] sm:$0xff]
    %v514 = vld [vmem:[#allocation10 + $0x188] sm:$0xff]
    %v515 = vld [vmem:[#allocation10 + $0x190] sm:$0xff]
    %v516 = vld [vmem:[#allocation10 + $0x198] sm:$0xff]
    %v517 = vld [vmem:[#allocation10 + $0x1a0] sm:$0xff]
    %v518 = vld [vmem:[#allocation10 + $0x1a8] sm:$0xff]
    %v519 = vld [vmem:[#allocation10 + $0x1b0] sm:$0xff]
    %v520 = vld [vmem:[#allocation10 + $0x1b8] sm:$0xff]
    %v521 = vld [vmem:[#allocation10 + $0x1c0] sm:$0xff]
    %v522 = vld [vmem:[#allocation10 + $0x1c8] sm:$0xff]
    %v523 = vld [vmem:[#allocation10 + $0x1d0] sm:$0xff]
    %v524 = vld [vmem:[#allocation10 + $0x1d8] sm:$0xff]
    %v525 = vld [vmem:[#allocation10 + $0x1e0] sm:$0xff]
    %v526 = vld [vmem:[#allocation10 + $0x1e8] sm:$0xff]
    %v527 = vld [vmem:[#allocation10 + $0x1f0] sm:$0xff]
    %v528 = vld [vmem:[#allocation10 + $0x1f8] sm:$0xff]
    %v529 = vld [vmem:[%s12] sm:$0x3]
    %v531 = vlaneseq
    %v532 = vshrl.u32 %v531, 7
    %v533 = vsub.s32 0, %v532
    %v534 = vrot.slane %v529, %v533
    %v535 = vlaneseq
    %v536 = vshrl.u32 %v535, 7
    %v537 = vsub.s32 1, %v536
    %v538 = vrot.slane %v529, %v537
    %541 = vmatprep.subr.mxu0 %v466
    %542 = vmatpush1.msra.mxu0 %v465
    %543 = vmatprep.subr.mxu0 %v468
    %544 = vmatpush1.msra.mxu0 %v467
    %545 = vmatprep.subr.mxu0 %v470
    %546 = vmatpush1.msra.mxu0 %v469
    %547 = vmatprep.subr.mxu0 %v472
    %548 = vmatpush1.msra.mxu0 %v471
    %549 = vmatprep.subr.mxu0 %v474
    %550 = vmatpush1.msra.mxu0 %v473
    %551 = vmatprep.subr.mxu0 %v476
    %552 = vmatpush1.msra.mxu0 %v475
    %553 = vmatprep.subr.mxu0 %v478
    %554 = vmatpush1.msra.mxu0 %v477
    %555 = vmatprep.subr.mxu0 %v480
    %556 = vmatpush1.msra.mxu0 %v479
    %557 = vmatprep.subr.mxu0 %v482
    %558 = vmatpush1.msra.mxu0 %v481
    %559 = vmatprep.subr.mxu0 %v484
    %560 = vmatpush1.msra.mxu0 %v483
    %561 = vmatprep.subr.mxu0 %v486
    %562 = vmatpush1.msra.mxu0 %v485
    %563 = vmatprep.subr.mxu0 %v488
    %564 = vmatpush1.msra.mxu0 %v487
    %565 = vmatprep.subr.mxu0 %v490
    %566 = vmatpush1.msra.mxu0 %v489
    %567 = vmatprep.subr.mxu0 %v492
    %568 = vmatpush1.msra.mxu0 %v491
    %569 = vmatprep.subr.mxu0 %v494
    %570 = vmatpush1.msra.mxu0 %v493
    %571 = vmatprep.subr.mxu0 %v496
    %572 = vmatpush1.msra.mxu0 %v495
    %573 = vmatprep.subr.mxu0 %v498
    %574 = vmatpush1.msra.mxu0 %v497
    %575 = vmatprep.subr.mxu0 %v500
    %576 = vmatpush1.msra.mxu0 %v499
    %577 = vmatprep.subr.mxu0 %v502
    %578 = vmatpush1.msra.mxu0 %v501
    %579 = vmatprep.subr.mxu0 %v504
    %580 = vmatpush1.msra.mxu0 %v503
    %581 = vmatprep.subr.mxu0 %v506
    %582 = vmatpush1.msra.mxu0 %v505
    %583 = vmatprep.subr.mxu0 %v508
    %584 = vmatpush1.msra.mxu0 %v507
    %585 = vmatprep.subr.mxu0 %v510
    %586 = vmatpush1.msra.mxu0 %v509
    %587 = vmatprep.subr.mxu0 %v512
    %588 = vmatpush1.msra.mxu0 %v511
    %589 = vmatprep.subr.mxu0 %v514
    %590 = vmatpush1.msra.mxu0 %v513
    %591 = vmatprep.subr.mxu0 %v516
    %592 = vmatpush1.msra.mxu0 %v515
    %593 = vmatprep.subr.mxu0 %v518
    %594 = vmatpush1.msra.mxu0 %v517
    %595 = vmatprep.subr.mxu0 %v520
    %596 = vmatpush1.msra.mxu0 %v519
    %597 = vmatprep.subr.mxu0 %v522
    %598 = vmatpush1.msra.mxu0 %v521
    %599 = vmatprep.subr.mxu0 %v524
    %600 = vmatpush1.msra.mxu0 %v523
    %601 = vmatprep.subr.mxu0 %v526
    %602 = vmatpush1.msra.mxu0 %v525
    %603 = vmatprep.subr.mxu0 %v528
    %604 = vmatpush1.msra.mxu0 %v527
    %605 = vmatprep.mubr.f32.mxu0 %v464
    %606 = vmatmul.mubr.f32.gmra.mrb[0].mxu0 %v463
    %v607 = vpop.f32.mrb[0].mxu0
    %v608 = vadd.f32 %v534, %v607
    %v609 = vpop.f32.mrb[0].mxu0
    %v610 = vadd.f32 %v538, %v609
    %611 = vdwg.mxu0
    %v612 = vsub.f32 0.0, %v608
    %v613 = vsub.f32 0.0, %v610
    %v614 = vmul.f32 %v612, 1.442695
    %v615 = vpow.pop %v614
    %v616 = vmul.f32 %v613, 1.442695
    %v617 = vpow.pop %v616
    %v618 = vadd.f32 %v615, 1.0
    %v619 = vadd.f32 %v617, 1.0
    %v620 = vrcp.pop %v618
    %v621 = vrcp.pop %v619
    %v624 = vcombine.low %v620, %v621
    %v626 = vunpack.c.l.s4 1983009808
    %v627 = vunpack.c.0.s8 %v626
    %v628 = vlaneseq
    %v629 = vshrl.u32 %v628, 7
    %v630 = vsub.s32 %v627, %v629
    %v631 = vrot.slane %v624, %v630
    %633 = vst [vmem:[#allocation11] sm:$0xf] %v631
    // Predicated region
    $region74: #{conv_cond_gen_forward.1} parent=1 // pred_check
      _
    $region75: #{conv_cond_gen_forward.1} parent=1 // pred_check_branch
      %635 = sbr.rel (0) target = $region77
    $region76: #{conv_cond_gen_forward.1} parent=1 // pred_region
      %s637 = ssub.s32 64, 64
      %638 = vsyncadd [#allocation4], %s637
      %s640 = sshll.u32 [#allocation11], 4
      %s641 = int_to_ptr.vmem [resolvable:$true] %s640
      %643 = dma.vmem_to_hbm [thread:$0]  %s641, 64, %s13, [#allocation4]
    $region77: #{conv_cond_gen_forward.1} parent=1 // pred_fallthru
      _
    // Predicated region
    $region78: #{conv_cond_gen_forward.1} parent=1 // pred_check
      _
    $region79: #{conv_cond_gen_forward.1} parent=1 // pred_check_branch
      %645 = sbr.rel (0) target = $region81
    $region80: #{conv_cond_gen_forward.1} parent=1 // pred_region
      %646 = dma.done [#allocation4], 64
    $region81: #{conv_cond_gen_forward.1} parent=1 // pred_fallthru
      _
    %647 = vsyncpa [#allocation3], 1
    %648 = vsyncpa [#allocation6], 1
    %649 = vsyncpa [#allocation9], 1
    %650 = vsyncpa [#allocation4], 1

</llo_original>
